<compile_context>
chip_gen: v6e
topology: v6e:2x2x1
jax: 0.10.0
libtpu: 0.0.40
codegen_flags: <defaults>
</compile_context>

<pallas_src>
import numpy as np
import jax
import jax.numpy as jnp
from jax.experimental import pallas as pl
from jax.experimental.pallas import tpu as pltpu


def _round_up(x, m):
    return (x + m - 1) // m * m


def _vmem_cap_bytes():
    """Per-core VMEM capacity; falls back to the smallest generation (v7x)."""
    try:
        return int(pltpu.get_tpu_info().vmem_capacity_bytes)
    except Exception:
        return 64 * 2 ** 20


# ---------------------------------------------------------------------------
# Stage 2: row/column-tiled "x @ w + b" matmul (hoisted projections, vocab head)
# ---------------------------------------------------------------------------
def _linear_kernel(x_ref, w_ref, b_ref, o_ref):
    o_ref[...] = (jnp.dot(x_ref[...], w_ref[...],
                          preferred_element_type=jnp.float32)
                  + b_ref[...]).astype(o_ref.dtype)


def linear_rows(x, w, b, *, tm=256, tn=2048, compute_dtype=None):
    """y = x @ w + b, tiled over rows (M) and, for wide outputs, columns (N)."""
    M, K = x.shape
    N = w.shape[1]
    if compute_dtype is not None:           # bf16 MXU operands, f32 accumulation
        x = x.astype(compute_dtype)
        w = w.astype(compute_dtype)
    b = b.astype(jnp.float32)

    tm = min(tm, _round_up(M, 8))
    Mp = _round_up(M, tm)
    if N > tn:
        tn_eff, Np = tn, _round_up(N, tn)
    else:
        tn_eff, Np = N, N
    if Mp != M:
        x = jnp.pad(x, ((0, Mp - M), (0, 0)))
    if Np != N:
        w = jnp.pad(w, ((0, 0), (0, Np - N)))
        b = jnp.pad(b, ((0, 0), (0, Np - N)))

    resident = 2 * (tm * K * x.dtype.itemsize + K * tn_eff * w.dtype.itemsize
                    + tn_eff * 4 + tm * tn_eff * 4)
    vmem_limit = int(min(0.85 * _vmem_cap_bytes(),
                         max(16 * 2 ** 20, 2 * resident)))

    y = pl.pallas_call(
        _linear_kernel,
        out_shape=jax.ShapeDtypeStruct((Mp, Np), jnp.float32),
        grid_spec=pltpu.PrefetchScalarGridSpec(
            num_scalar_prefetch=0,
            grid=(Mp // tm, Np // tn_eff),
            in_specs=[pl.BlockSpec((tm, K), lambda i, j: (i, 0)),
                      pl.BlockSpec((K, tn_eff), lambda i, j: (0, j)),
                      pl.BlockSpec((1, tn_eff), lambda i, j: (0, j))],
            out_specs=pl.BlockSpec((tm, tn_eff), lambda i, j: (i, j)),
        ),
        compiler_params=pltpu.CompilerParams(
            dimension_semantics=("parallel", "parallel"),
            vmem_limit_bytes=vmem_limit),
    )(x, w, b)
    return y[:M, :N]


# ---------------------------------------------------------------------------
# Stage 1: recurrent decode kernel (TT time steps per grid iteration)
# ---------------------------------------------------------------------------
def decoder_step_kernel(
    enc_ref,                 # (TB, P, E)   encoder tile (time-invariant)
    att1_ref,                # (TB, P, A)   hoisted enc @ w_enc_att + b
    h0_ref, c0_ref,          # (TB, D)      hoisted init_hidden_state
    x_ih_ref,                # (TT, TB, 4D) precomputed emb @ w_ih_e + b_ih
    w_full_ref, b_full_ref,  # (1, 1, A), (1, 1)
    w_h_ref, b_h_ref,        # (D, Ap+Ep+4D), (1, Ap+Ep+4D) fused, lane-aligned
    w_ih_a_ref,              # (E, 4D)
    h_out_ref,               # (TT, TB, D)  h_t (consumed by the batched fc matmul)
    h_scr, c_scr,            # (TB, D)      persistent LSTM state (f32)
):
    TT = x_ih_ref.shape[0]
    TB, P, E = enc_ref.shape
    A = att1_ref.shape[2]
    D = h_scr.shape[1]
    Ap = _round_up(A, 128)   # segment starts inside w_h are 128-lane aligned
    Ep = _round_up(E, 128)

    # Seed the recurrent state from the hoisted init (no matmuls at t == 0).
    @pl.when(pl.program_id(1) == 0)
    def _seed():
        h_scr[...] = h0_ref[...]
        c_scr[...] = c0_ref[...]

    enc = enc_ref[...]
    att1 = att1_ref[...]
    w_full = w_full_ref[...]
    b_full = b_full_ref[...]
    w_h = w_h_ref[...]
    b_h = b_h_ref[...]
    w_ih_a = w_ih_a_ref[...]
    h = h_scr[...]
    c = c_scr[...]

    for tt in range(TT):     # static unroll over the time block
        # One fused matmul for every h-dependent projection:
        #   [ decoder_att | f_beta | lstm hh ]   (padded columns are zero)
        hproj = (jnp.dot(h.astype(w_h.dtype), w_h,
                         preferred_element_type=jnp.float32) + b_h)
        att2 = hproj[:, :A]                                            # (TB, A)
        gate = jax.nn.sigmoid(hproj[:, Ap:Ap + E])                     # (TB, E)
        hh = hproj[:, Ap + Ep:]                                        # (TB, 4D)

        # ---------------- Attention (lane-dense (TB, P) scores) ----------------
        att = jnp.maximum(att1 + att2[:, None, :], 0.0)                # (TB, P, A)
        scores = jnp.sum(att * w_full, axis=2) + b_full                # (TB, P)
        m = jnp.max(scores, axis=1, keepdims=True)
        e = jnp.exp(scores - m)
        alpha = e / jnp.sum(e, axis=1, keepdims=True)                  # (TB, P)
        # Weighted encoding: per-row matvec is degenerate on the MXU, so do it
        # as a VPU multiply + reduce over P (keeps the MXU slot for the matmuls).
        awe = gate * jnp.sum(alpha[:, :, None] * enc, axis=1)          # (TB, E)

        # ---------------- LSTMCell ----------------
        gates = (x_ih_ref[tt]
                 + jnp.dot(awe.astype(w_ih_a.dtype), w_ih_a,
                           preferred_element_type=jnp.float32)
                 + hh)                                                 # (TB, 4D)
        i_g = jax.nn.sigmoid(gates[:, 0:D])
        f_g = jax.nn.sigmoid(gates[:, D:2 * D])
        g_g = jnp.tanh(gates[:, 2 * D:3 * D])
        o_g = jax.nn.sigmoid(gates[:, 3 * D:4 * D])
        c = f_g * c + i_g * g_g
        h = o_g * jnp.tanh(c)
        h_out_ref[tt] = h.astype(h_out_ref.dtype)

    h_scr[...] = h
    c_scr[...] = c


# ---------------------------------------------------------------------------
# Parameters / wrapper
# ---------------------------------------------------------------------------
def init_params(key, *, vocab_size, embed_dim, decoder_dim, attention_dim, encoder_dim):
    D, E, A, V, M = decoder_dim, encoder_dim, attention_dim, vocab_size, embed_dim
    ks = jax.random.split(key, 20)

    def u(k, shape, s=0.1):
        return jax.random.uniform(k, shape, jnp.float32, -s, s)

    return dict(
        embedding=u(ks[0], (V, M)),
        w_enc_att=u(ks[1], (E, A)), b_enc_att=u(ks[2], (1, A)),
        w_dec_att=u(ks[3], (D, A)), b_dec_att=u(ks[4], (1, A)),
        w_full=u(ks[5], (1, 1, A)), b_full=u(ks[6], (1, 1)),
        w_init_h=u(ks[7], (E, D)), b_init_h=u(ks[8], (1, D)),
        w_init_c=u(ks[9], (E, D)), b_init_c=u(ks[10], (1, D)),
        w_fbeta=u(ks[11], (D, E)), b_fbeta=u(ks[12], (1, E)),
        w_ih_e=u(ks[13], (M, 4 * D)), w_ih_a=u(ks[14], (E, 4 * D)),
        b_ih=u(ks[15], (1, 4 * D)),
        w_hh=u(ks[16], (D, 4 * D)), b_hh=u(ks[17], (1, 4 * D)),
        w_fc=u(ks[18], (D, V)), b_fc=u(ks[19], (1, V)),
    )


def run_decoder(params, encoder_out_nchw, encoded_captions, caption_lengths,
                *, batch_tile=128, time_tile=4, use_bf16=False):
    """Pallas implementation of DecoderWithAttention.forward (eval mode)."""
    B, E, H, W = encoder_out_nchw.shape
    P = H * W
    D = params["w_hh"].shape[0]
    A = params["w_enc_att"].shape[1]
    V = params["w_fc"].shape[1]
    cd = jnp.bfloat16 if use_bf16 else None

    # TODO(synk): nn.Dropout / nn.Dropout2d are stochastic; evaluated as identity (eval mode).
    enc = jnp.transpose(encoder_out_nchw, (0, 2, 3, 1)).reshape(B, P, E)

    decode_lengths = [int(l) - 1 for l in caption_lengths]
    T = max(decode_lengths)
    TT = max(1, min(time_tile, T))          # time steps per grid iteration
    T_pad = _round_up(T, TT)

    # ---- batch tile sized to MXU rows, bounded by the per-core VMEM ----
    cap = _vmem_cap_bytes()
    enc_bytes = 2 if use_bf16 else 4

    def _tile_resident(tb):
        return (tb * P * E * enc_bytes          # enc (single-buffered)
                + tb * P * A * enc_bytes        # att1
                + 2 * tb * D * 4                # h0, c0
                + 2 * TT * tb * 4 * D * 4       # x_ih (double-buffered)
                + 2 * TT * tb * D * 4           # h_out (double-buffered)
                + 2 * tb * D * 4                # h/c scratch
                + 3 * tb * P * A * 4)           # in-kernel attention temporaries

    if B <= batch_tile:
        TB = B
    else:
        TB = batch_tile
        while TB > 8 and _tile_resident(TB) > 0.6 * cap:
            TB //= 2
    B_pad = _round_up(B, TB)
    nb = B_pad // TB
    if B_pad != B:
        enc = jnp.pad(enc, ((0, B_pad - B), (0, 0), (0, 0)))

    # ---- hoisted, time-invariant matmuls (full B*P / T*B batching on the MXU) ----
    mean_enc = jnp.mean(enc, axis=1)                                       # (B_pad, E)
    h0 = linear_rows(mean_enc, params["w_init_h"], params["b_init_h"], compute_dtype=cd)
    c0 = linear_rows(mean_enc, params["w_init_c"], params["b_init_c"], compute_dtype=cd)
    att1 = linear_rows(enc.reshape(B_pad * P, E), params["w_enc_att"],
                       params["b_enc_att"], compute_dtype=cd).reshape(B_pad, P, A)
    if use_bf16:
        att1 = att1.astype(jnp.bfloat16)

    Memb = params["embedding"].shape[1]
    emb = params["embedding"][encoded_captions][:, :T, :]                  # (B, T, Memb)
    emb_tb = jnp.transpose(emb, (1, 0, 2)).reshape(T * B, Memb)
    x_ih = linear_rows(emb_tb, params["w_ih_e"], params["b_ih"],
                       compute_dtype=cd).reshape(T, B, 4 * D)
    x_ih = jnp.pad(x_ih, ((0, T_pad - T), (0, B_pad - B), (0, 0)))

    # ---- fused h-projection with 128-lane-aligned segment starts ----
    Ap = _round_up(A, 128)
    Ep = _round_up(E, 128)

    def pad_cols(m, n):
        return jnp.pad(m, ((0, 0), (0, n - m.shape[1])))

    w_h = jnp.concatenate([pad_cols(params["w_dec_att"], Ap),
                           pad_cols(params["w_fbeta"], Ep),
                           params["w_hh"]], axis=1)
    b_h = jnp.concatenate([pad_cols(params["b_dec_att"], Ap),
                           pad_cols(params["b_fbeta"], Ep),
                           params["b_hh"]], axis=1)
    w_ih_a = params["w_ih_a"]
    if use_bf16:
        enc_in = enc.astype(jnp.bfloat16)
        w_h = w_h.astype(jnp.bfloat16)
        w_ih_a = w_ih_a.astype(jnp.bfloat16)
    else:
        enc_in = enc

    weights = [params["w_full"], params["b_full"], w_h, b_h, w_ih_a]
    wbytes = sum(int(np.prod(w.shape)) * w.dtype.itemsize for w in weights)
    vmem_limit = int(min(0.85 * cap,
                         max(16 * 2 ** 20, 2 * (_tile_resident(TB) + wbytes))))

    def stage1(single_buffer_invariants):
        def inv(shape, imap):
            if single_buffer_invariants:
                return pl.BlockSpec(shape, imap, pipeline_mode=pl.Buffered(1))
            return pl.BlockSpec(shape, imap)

        in_specs = [
            inv((TB, P, E), lambda b, t: (b, 0, 0)),                 # enc (invariant in t)
            inv((TB, P, A), lambda b, t: (b, 0, 0)),                 # att1
            inv((TB, D), lambda b, t: (b, 0)),                       # h0
            inv((TB, D), lambda b, t: (b, 0)),                       # c0
            pl.BlockSpec((TT, TB, 4 * D), lambda b, t: (t, b, 0)),   # x_ih (per step)
        ] + [inv(tuple(w.shape), (lambda n: (lambda b, t: (0,) * n))(w.ndim))
             for w in weights]

        return pl.pallas_call(
            decoder_step_kernel,
            out_shape=jax.ShapeDtypeStruct((T_pad, B_pad, D), jnp.float32),
            grid_spec=pltpu.PrefetchScalarGridSpec(
                num_scalar_prefetch=0,
                grid=(nb, T_pad // TT),
                in_specs=in_specs,
                out_specs=pl.BlockSpec((TT, TB, D), lambda b, t: (t, b, 0)),
                scratch_shapes=[pltpu.VMEM((TB, D), jnp.float32),    # h
                                pltpu.VMEM((TB, D), jnp.float32)],   # c
            ),
            compiler_params=pltpu.CompilerParams(
                dimension_semantics=("parallel", "arbitrary"),
                vmem_limit_bytes=vmem_limit),
        )(enc_in, att1, h0, c0, x_ih, *weights)

    try:
        h_seq = jax.block_until_ready(stage1(True))
    except Exception:
        # pipeline_mode=pl.Buffered(1) not supported on this build: fall back
        # to default double-buffering (correct, just uses more VMEM).
        h_seq = stage1(False)

    # Vocab projection batched over all T*B rows, N-tiled for large vocabs.
    h_flat = h_seq[:T, :B, :].reshape(T * B, D)
    logits = linear_rows(h_flat, params["w_fc"], params["b_fc"],
                         compute_dtype=cd).reshape(T, B, V)
    predictions = jnp.transpose(logits, (1, 0, 2))                     # (B, T, V)

    # Rows past their decode length keep the reference's zero predictions.
    lens = jnp.asarray(decode_lengths, dtype=jnp.int32)
    active = jnp.arange(T, dtype=jnp.int32)[None, :] < lens[:, None]   # (B, T)
    predictions = jnp.where(active[:, :, None], predictions, 0.0)
    return predictions, decode_lengths


# ---------------------------------------------------------------------------
# Pure NumPy reference mirroring the PyTorch forward (eval mode)
# ---------------------------------------------------------------------------
def reference_forward(params, encoder_out_nchw, encoded_captions, caption_lengths):
    p = {k: np.asarray(v, dtype=np.float32) for k, v in params.items()}
    enc_nchw = np.asarray(encoder_out_nchw, dtype=np.float32)
    caps = np.asarray(encoded_captions)
    B, E, H, W = enc_nchw.shape
    enc = np.transpose(enc_nchw, (0, 2, 3, 1)).reshape(B, H * W, E)
    emb = p["embedding"][caps]
    dls = [int(l) - 1 for l in caption_lengths]
    T = max(dls)
    V = p["b_fc"].shape[-1]
    D = p["w_hh"].shape[0]

    def sigmoid(x):
        return 1.0 / (1.0 + np.exp(-x))

    mean_enc = enc.mean(axis=1)
    h = mean_enc @ p["w_init_h"] + p["b_init_h"]
    c = mean_enc @ p["w_init_c"] + p["b_init_c"]
    w_ih = np.concatenate([p["w_ih_e"], p["w_ih_a"]], axis=0)
    out = np.zeros((B, T, V), dtype=np.float32)
    for t in range(T):
        bt = sum(l > t for l in dls)
        e_b, h_b, c_b = enc[:bt], h[:bt], c[:bt]
        att1 = e_b @ p["w_enc_att"] + p["b_enc_att"]
        att2 = h_b @ p["w_dec_att"] + p["b_dec_att"]
        att = np.maximum(att1 + att2[:, None, :], 0.0)
        sc = (att * p["w_full"]).sum(-1) + p["b_full"]
        sc = sc - sc.max(axis=1, keepdims=True)
        al = np.exp(sc)
        al = al / al.sum(axis=1, keepdims=True)
        awe = (e_b * al[:, :, None]).sum(axis=1)
        gate = sigmoid(h_b @ p["w_fbeta"] + p["b_fbeta"])
        awe = gate * awe
        x = np.concatenate([emb[:bt, t, :], awe], axis=1)
        gates = x @ w_ih + p["b_ih"] + h_b @ p["w_hh"] + p["b_hh"]
        i = sigmoid(gates[:, :D])
        f = sigmoid(gates[:, D:2 * D])
        g = np.tanh(gates[:, 2 * D:3 * D])
        o = sigmoid(gates[:, 3 * D:])
        c_new = f * c_b + i * g
        h_new = o * np.tanh(c_new)
        out[:bt, t, :] = h_new @ p["w_fc"] + p["b_fc"]
        h = np.concatenate([h_new, h[bt:]], axis=0)
        c = np.concatenate([c_new, c[bt:]], axis=0)
    return out


if __name__ == "__main__":
    key = jax.random.PRNGKey(0)
    B, encoder_dim, Hs, Ws = 2, 32, 4, 4
    embed_dim, decoder_dim, attention_dim, vocab_size = 16, 32, 16, 48
    k_enc, k_cap, k_par = jax.random.split(key, 3)

    params = init_params(
        k_par,
        vocab_size=vocab_size, embed_dim=embed_dim, decoder_dim=decoder_dim,
        attention_dim=attention_dim, encoder_dim=encoder_dim,
    )

    encoder_out = jax.random.normal(k_enc, (B, encoder_dim, Hs, Ws), jnp.float32)
    Tcap = 8
    encoded_captions = jax.random.randint(k_cap, (B, Tcap), 0, vocab_size)
    # sorted by decreasing length, as the PyTorch training loop assumes
    caption_lengths = [8, 6]

    ref = reference_forward(params, encoder_out, encoded_captions, caption_lengths)

    # f32 path — matches the PyTorch reference tightly.
    predictions, decode_lengths = run_decoder(
        params, encoder_out, encoded_captions, caption_lengths)
    predictions = jax.block_until_ready(predictions)
    assert predictions.shape == ref.shape, (predictions.shape, ref.shape)
    err = float(np.max(np.abs(np.asarray(predictions) - ref)))
    assert np.allclose(np.asarray(predictions), ref, atol=1e-3, rtol=1e-3), err

    # bf16 MXU-operand path (f32 accumulation) — looser tolerance by design.
    preds_bf16, _ = run_decoder(
        params, encoder_out, encoded_captions, caption_lengths, use_bf16=True)
    preds_bf16 = jax.block_until_ready(preds_bf16)
    err_bf16 = float(np.max(np.abs(np.asarray(preds_bf16) - ref)))
    assert err_bf16 < 0.1, err_bf16

    print("KERNEL_OK")
</pallas_src>

<mosaic_0001>
module attributes {stable_mosaic.version = 11 : i64} {
  func.func @_linear_kernel(%arg0: i32, %arg1: i32, %arg2: memref<8x32xf32, #tpu.memory_space<vmem>>, %arg3: memref<32x32xf32, #tpu.memory_space<vmem>>, %arg4: memref<1x32xf32, #tpu.memory_space<vmem>>, %arg5: memref<8x32xf32, #tpu.memory_space<vmem>>) attributes {dimension_semantics = [#tpu.dimension_semantics<parallel>, #tpu.dimension_semantics<parallel>], iteration_bounds = array<i64: 1, 1>, scalar_prefetch = 0 : i64, scratch_operands = 0 : i64, tpu.core_type = #tpu.core_type<tc>, window_params = [{transform_indices = @transform_0, window_bounds = array<i64: 8, 32>}, {transform_indices = @transform_1, window_bounds = array<i64: 32, 32>}, {transform_indices = @transform_2, window_bounds = array<i64: 1, 32>}, {transform_indices = @transform_3, window_bounds = array<i64: 8, 32>}]} {
    %c0 = arith.constant 0 : index
    %c0_0 = arith.constant 0 : index
    %0 = vector.load %arg2[%c0, %c0_0] : memref<8x32xf32, #tpu.memory_space<vmem>>, vector<8x32xf32>
    %c0_1 = arith.constant 0 : index
    %c0_2 = arith.constant 0 : index
    %1 = vector.load %arg3[%c0_1, %c0_2] : memref<32x32xf32, #tpu.memory_space<vmem>>, vector<32x32xf32>
    %cst = arith.constant dense<0.000000e+00> : vector<8x32xf32>
    %2 = tpu.matmul %0, %1, %cst {dimension_numbers = #tpu.dot_dimension_numbers<[1], [0], [0], [1], [0, 0, 1, 1], [], []>} : vector<8x32xf32>, vector<32x32xf32>, vector<8x32xf32> -> vector<8x32xf32>
    %c0_3 = arith.constant 0 : index
    %c0_4 = arith.constant 0 : index
    %3 = vector.load %arg4[%c0_3, %c0_4] : memref<1x32xf32, #tpu.memory_space<vmem>>, vector<1x32xf32>
    %4 = vector.broadcast %3 : vector<1x32xf32> to vector<8x32xf32>
    %5 = arith.addf %2, %4 : vector<8x32xf32>
    %c0_5 = arith.constant 0 : index
    %c0_6 = arith.constant 0 : index
    %6 = vector.load %arg5[%c0_5, %c0_6] : memref<8x32xf32, #tpu.memory_space<vmem>>, vector<8x32xf32>
    tpu.vector_store %arg5[%c0_5, %c0_6], %5 {strides = array<i32>} : memref<8x32xf32, #tpu.memory_space<vmem>>, vector<8x32xf32>,
    return
  }
  func.func @transform_0(%arg0: i32, %arg1: i32) -> (i32, i32) {
    %c0_i32 = arith.constant 0 : i32
    %c0_i32_0 = arith.constant 0 : i32
    return %arg0, %c0_i32 : i32, i32
  }
  func.func @transform_1(%arg0: i32, %arg1: i32) -> (i32, i32) {
    %c0_i32 = arith.constant 0 : i32
    %c0_i32_0 = arith.constant 0 : i32
    return %c0_i32, %arg1 : i32, i32
  }
  func.func @transform_2(%arg0: i32, %arg1: i32) -> (i32, i32) {
    %c0_i32 = arith.constant 0 : i32
    %c0_i32_0 = arith.constant 0 : i32
    return %c0_i32, %arg1 : i32, i32
  }
  func.func @transform_3(%arg0: i32, %arg1: i32) -> (i32, i32) {
    %c0_i32 = arith.constant 0 : i32
    return %arg0, %arg1 : i32, i32
  }
}

</mosaic_0001>

<llo_original>
// kernel: tpu_custom_call.1
$region0: #{tpu_custom_call.1}
  #allocation0 [shape = 'u32[]', space=smem, size = 0x4, offset = 0x4, fixed_abs, tag = 'smem constant byte address 0x4 - core index']
  #allocation1 [shape = 'u32[144,128]{1,0:T(1,128)}', space=vmem, size = 0x12000, scoped, tag = 'internal scratch']
  %s0 = inlined_call_operand.hbm [shape: f32[8,32], index: 0, kind: input, shape index: {}]
  %s1 = inlined_call_operand.hbm [shape: f32[32,32], index: 1, kind: input, shape index: {}]
  %s2 = inlined_call_operand.vmem [shape: f32[1,32], index: 2, kind: input, shape index: {}]
  %s3 = inlined_call_operand.hbm [shape: f32[8,32], index: 3, kind: output, shape index: {}]
  %s4 = sld [smem:[#allocation0]]
  $region30: #{tpu_custom_call.1} parent=0
    _
  %s6 = ssub.s32 1, %s4
  %s7 = scalar_select 0, %s6, %s4
  $region1: #{tpu_custom_call.1} parent=0
    #allocation2 [shape = 'u8[4096]{0}', space=vmem, size = 0x1000, scoped, tag = 'input window, operand 0, single buffered']
    #allocation3 [shape = 's32[1]{0}', space=sflag, size = 0x4, scoped, tag = 'scoped memory for tpu_custom_call.1']
    #allocation4 [shape = 's32[1]{0}', space=sflag, size = 0x4, scoped, tag = 'scoped memory for tpu_custom_call.1']
    #allocation5 [shape = 'u8[16384]{0}', space=vmem, size = 0x4000, scoped, tag = 'input window, operand 1, single buffered']
    #allocation6 [shape = 's32[1]{0}', space=sflag, size = 0x4, scoped, tag = 'scoped memory for tpu_custom_call.1']
    #allocation7 [shape = 'u8[4096]{0}', space=vmem, size = 0x1000, scoped, tag = 'output window, operand 0, single buffered']
    %8 = vsyncpa [#allocation3], 0
    %9 = vsyncpa [#allocation6], 0
    %10 = vsyncpa [#allocation4], 0
    // Predicated region
    $region2: #{tpu_custom_call.1} parent=1 // pred_check
      _
    $region3: #{tpu_custom_call.1} parent=1 // pred_check_branch
      %12 = sbr.rel (0) target = $region5
    $region4: #{tpu_custom_call.1} parent=1 // pred_region
      %s14 = ssub.s32 128, 128
      %15 = vsyncadd [#allocation3], %s14
      %s17 = sshll.u32 [#allocation2], 4
      %s18 = int_to_ptr.vmem [resolvable:$true] %s17
      %20 = dma.hbm_to_vmem [thread:$0]  %s0, 128, %s18, [#allocation3]
    $region5: #{tpu_custom_call.1} parent=1 // pred_fallthru
      _
    // Predicated region
    $region6: #{tpu_custom_call.1} parent=1 // pred_check
      _
    $region7: #{tpu_custom_call.1} parent=1 // pred_check_branch
      %22 = sbr.rel (0) target = $region9
    $region8: #{tpu_custom_call.1} parent=1 // pred_region
      %s24 = ssub.s32 512, 512
      %25 = vsyncadd [#allocation6], %s24
      %s26 = sshll.u32 [#allocation5], 4
      %s27 = int_to_ptr.vmem [resolvable:$true] %s26
      %32 = dma.hbm_to_vmem [thread:$0]  %s1, 512, %s27, [#allocation6], 128, 128, 8
    $region9: #{tpu_custom_call.1} parent=1 // pred_fallthru
      _
    // Predicated region
    $region10: #{tpu_custom_call.1} parent=1 // pred_check
      _
    $region11: #{tpu_custom_call.1} parent=1 // pred_check_branch
      %34 = sbr.rel (0) target = $region13
    $region12: #{tpu_custom_call.1} parent=1 // pred_region
      _
    $region13: #{tpu_custom_call.1} parent=1 // pred_fallthru
      _
    // Predicated region
    $region14: #{tpu_custom_call.1} parent=1 // pred_check
      _
    $region15: #{tpu_custom_call.1} parent=1 // pred_check_branch
      %36 = sbr.rel (0) target = $region17
    $region16: #{tpu_custom_call.1} parent=1 // pred_region
      %37 = dma.done [#allocation3], 128
    $region17: #{tpu_custom_call.1} parent=1 // pred_fallthru
      _
    // Predicated region
    $region18: #{tpu_custom_call.1} parent=1 // pred_check
      _
    $region19: #{tpu_custom_call.1} parent=1 // pred_check_branch
      %39 = sbr.rel (0) target = $region21
    $region20: #{tpu_custom_call.1} parent=1 // pred_region
      %40 = dma.done [#allocation6], 512
    $region21: #{tpu_custom_call.1} parent=1 // pred_fallthru
      _
    %v41 = vld [vmem:[#allocation2] sm:$0xff]
    %v42 = vld [vmem:[#allocation5] sm:$0xff]
    %v43 = vld [vmem:[#allocation5 + $0x8] sm:$0xff]
    %v44 = vld [vmem:[#allocation5 + $0x10] sm:$0xff]
    %v45 = vld [vmem:[#allocation5 + $0x18] sm:$0xff]
    %v46 = vld [vmem:[%s2] sm:$0x1]
    %v48 = vlaneseq
    %v49 = vshrl.u32 %v48, 7
    %v50 = vsub.s32 0, %v49
    %v51 = vrot.slane %v46, %v50
    %vm53 = vcmask 261120
    %v55 = vsel %vm53, %v41, 0
    %57 = vmatprep.subr.mxu0 0.0
    %58 = vmatpush1.msra.mxu0 0.0
    %59 = vmatprep.subr.mxu0 0.0
    %60 = vmatpush1.msra.mxu0 0.0
    %61 = vmatprep.subr.mxu0 0.0
    %62 = vmatpush1.msra.mxu0 0.0
    %63 = vmatprep.subr.mxu0 0.0
    %64 = vmatpush1.msra.mxu0 0.0
    %65 = vmatprep.subr.mxu0 0.0
    %66 = vmatpush1.msra.mxu0 0.0
    %67 = vmatprep.subr.mxu0 0.0
    %68 = vmatpush1.msra.mxu0 0.0
    %69 = vmatprep.subr.mxu0 0.0
    %70 = vmatpush1.msra.mxu0 0.0
    %71 = vmatprep.subr.mxu0 0.0
    %72 = vmatpush1.msra.mxu0 0.0
    %73 = vmatprep.subr.mxu0 0.0
    %74 = vmatpush1.msra.mxu0 0.0
    %75 = vmatprep.subr.mxu0 0.0
    %76 = vmatpush1.msra.mxu0 0.0
    %77 = vmatprep.subr.mxu0 0.0
    %78 = vmatpush1.msra.mxu0 0.0
    %79 = vmatprep.subr.mxu0 0.0
    %80 = vmatpush1.msra.mxu0 0.0
    %81 = vmatprep.subr.mxu0 0.0
    %82 = vmatpush1.msra.mxu0 %v45
    %83 = vmatprep.subr.mxu0 0.0
    %84 = vmatpush1.msra.mxu0 %v44
    %85 = vmatprep.subr.mxu0 0.0
    %86 = vmatpush1.msra.mxu0 %v43
    %87 = vmatprep.subr.mxu0 0.0
    %88 = vmatpush1.msra.mxu0 %v42
    %89 = vmatprep.subr.mxu0 0.0
    %90 = vmatpush2.msra.mxu0 0.0
    %91 = vmatprep.subr.mxu0 0.0
    %92 = vmatpush2.msra.mxu0 0.0
    %93 = vmatprep.subr.mxu0 0.0
    %94 = vmatpush2.msra.mxu0 0.0
    %95 = vmatprep.subr.mxu0 0.0
    %96 = vmatpush2.msra.mxu0 0.0
    %97 = vmatprep.subr.mxu0 0.0
    %98 = vmatpush2.msra.mxu0 0.0
    %99 = vmatprep.subr.mxu0 0.0
    %100 = vmatpush2.msra.mxu0 0.0
    %101 = vmatprep.subr.mxu0 0.0
    %102 = vmatpush2.msra.mxu0 0.0
    %103 = vmatprep.subr.mxu0 0.0
    %104 = vmatpush2.msra.mxu0 0.0
    %105 = vmatprep.subr.mxu0 0.0
    %106 = vmatpush2.msra.mxu0 0.0
    %107 = vmatprep.subr.mxu0 0.0
    %108 = vmatpush2.msra.mxu0 0.0
    %109 = vmatprep.subr.mxu0 0.0
    %110 = vmatpush2.msra.mxu0 0.0
    %111 = vmatprep.subr.mxu0 0.0
    %112 = vmatpush2.msra.mxu0 0.0
    %113 = vmatprep.subr.mxu0 0.0
    %114 = vmatpush2.msra.mxu0 0.0
    %115 = vmatprep.subr.mxu0 0.0
    %116 = vmatpush2.msra.mxu0 0.0
    %117 = vmatprep.subr.mxu0 0.0
    %118 = vmatpush2.msra.mxu0 0.0
    %119 = vmatprep.subr.mxu0 0.0
    %120 = vmatpush2.msra.mxu0 0.0
    %121 = vmatprep.mubr.f32.mxu0 0.0
    %122 = vmatmul.mubr.f32.gmra.mxu0 %v55
    %v123 = vpop.f32.mrf.mxu0
    %v124 = vadd.f32 %v51, %v123
    %v125 = vpop.f32.mrf.mxu0
    %126 = vdwg.mxu0
    %127 = vst.msk [vmem:[#allocation7] sm:$0xff] %vm53, %v124
    // Predicated region
    $region22: #{tpu_custom_call.1} parent=1 // pred_check
      _
    $region23: #{tpu_custom_call.1} parent=1 // pred_check_branch
      %129 = sbr.rel (0) target = $region25
    $region24: #{tpu_custom_call.1} parent=1 // pred_region
      %s131 = ssub.s32 128, 128
      %132 = vsyncadd [#allocation4], %s131
      %s134 = sshll.u32 [#allocation7], 4
      %s135 = int_to_ptr.vmem [resolvable:$true] %s134
      %137 = dma.vmem_to_hbm [thread:$0]  %s135, 128, %s3, [#allocation4]
    $region25: #{tpu_custom_call.1} parent=1 // pred_fallthru
      _
    // Predicated region
    $region26: #{tpu_custom_call.1} parent=1 // pred_check
      _
    $region27: #{tpu_custom_call.1} parent=1 // pred_check_branch
      %139 = sbr.rel (0) target = $region29
    $region28: #{tpu_custom_call.1} parent=1 // pred_region
      %140 = dma.done [#allocation4], 128
    $region29: #{tpu_custom_call.1} parent=1 // pred_fallthru
      _
    %141 = vsyncpa [#allocation3], 1
    %142 = vsyncpa [#allocation6], 1
    %143 = vsyncpa [#allocation4], 1

</llo_original>
